<compile_context>
chip_gen: v5e
topology: v5e:2x2
jax: 0.10.0
libtpu: 0.0.40
codegen_flags: <defaults>
</compile_context>

<pallas_src>
import functools

import jax
import jax.numpy as jnp
from jax.experimental import pallas as pl
from jax.experimental.pallas import tpu as pltpu


def _relu(x):
    return jnp.maximum(x, 0.0)


def _round_up(n, m):
    return ((n + m - 1) // m) * m


def vae_kernel(x_ref, eps_ref,
               we0_ref, be0_ref, we1_ref, be1_ref, we2_ref, be2_ref,
               whd_ref, bhd_ref, wd0_ref, bd0_ref, wd1_ref, bd1_ref,
               wd2_ref, bd2_ref,
               encmulv_ref, dec_ref, *, latent_dim):
    f32 = jnp.float32
    bf16 = jnp.bfloat16
    L = latent_dim

    def mm(a, w_ref):
        # bf16 inputs, f32 accumulation on the MXU
        return jnp.dot(a.astype(bf16), w_ref[...], preferred_element_type=f32)

    # ---- encoder ----
    h = _relu(mm(x_ref[...], we0_ref) + be0_ref[...])
    h = _relu(mm(h, we1_ref) + be1_ref[...])
    enc = _relu(mm(h, we2_ref) + be2_ref[...])

    # ---- fused mu / log_var head: one (L -> 2L) matmul ----
    heads = mm(enc, whd_ref) + bhd_ref[...]          # (TB, 2L) = [mu | log_var]
    mu = heads[:, :L]
    lv = heads[:, L:]

    # ---- reparameterize: z = mu + eps * exp(0.5 * log_var) ----
    z = mu + eps_ref[...] * jnp.exp(0.5 * lv)

    # ---- decoder ----
    d = _relu(mm(z, wd0_ref) + bd0_ref[...])
    d = _relu(mm(d, wd1_ref) + bd1_ref[...])
    logits = mm(d, wd2_ref) + bd2_ref[...]

    # sigmoid(x) = 0.5*tanh(0.5*x) + 0.5 : single EUP transcendental, exact
    dec_ref[...] = 0.5 * jnp.tanh(0.5 * logits) + 0.5

    # ---- lane-dense output slab: [enc | mu | log_var | zero pad] ----
    # Direct sub-slice stores (no in-kernel concatenate); HBM writeback of the
    # block is a full, unmasked 128-lane-multiple store.
    tb, enc_w = encmulv_ref.shape
    encmulv_ref[:, :L] = enc
    encmulv_ref[:, L:3 * L] = heads
    if enc_w > 3 * L:
        encmulv_ref[:, 3 * L:] = jnp.zeros((tb, enc_w - 3 * L), f32)


def init_params(key, input_dim, hidden_dim, latent_dim):
    """Deterministic synthetic parameters. Weights stored as (in, out)."""
    def linear(key, fan_in, fan_out):
        kw, kb = jax.random.split(key)
        bound = 1.0 / jnp.sqrt(fan_in)
        w = jax.random.uniform(kw, (fan_in, fan_out), jnp.float32, -bound, bound)
        b = jax.random.uniform(kb, (1, fan_out), jnp.float32, -bound, bound)
        return w, b

    keys = jax.random.split(key, 8)
    params = {}
    params["we0"], params["be0"] = linear(keys[0], input_dim, hidden_dim)
    params["we1"], params["be1"] = linear(keys[1], hidden_dim, hidden_dim)
    params["we2"], params["be2"] = linear(keys[2], hidden_dim, latent_dim)
    params["wmu"], params["bmu"] = linear(keys[3], latent_dim, latent_dim)
    params["wlv"], params["blv"] = linear(keys[4], latent_dim, latent_dim)
    params["wd0"], params["bd0"] = linear(keys[5], latent_dim, hidden_dim)
    params["wd1"], params["bd1"] = linear(keys[6], hidden_dim, hidden_dim)
    params["wd2"], params["bd2"] = linear(keys[7], hidden_dim, input_dim)
    return params


def pack_params(params):
    """Fuse mu/log_var heads and cast weights to bf16 (biases stay f32)."""
    bf16 = jnp.bfloat16
    return {
        "we0": params["we0"].astype(bf16), "be0": params["be0"],
        "we1": params["we1"].astype(bf16), "be1": params["be1"],
        "we2": params["we2"].astype(bf16), "be2": params["be2"],
        "whd": jnp.concatenate([params["wmu"], params["wlv"]], axis=1).astype(bf16),
        "bhd": jnp.concatenate([params["bmu"], params["blv"]], axis=1),
        "wd0": params["wd0"].astype(bf16), "bd0": params["bd0"],
        "wd1": params["wd1"].astype(bf16), "bd1": params["bd1"],
        "wd2": params["wd2"].astype(bf16), "bd2": params["bd2"],
    }


@jax.jit
def vae_forward(x_img, eps, packed):
    """x_img: (B, C, H, W) f32 NCHW. Returns (encoded, decoded, mu, log_var)."""
    B = x_img.shape[0]
    x = x_img.reshape(B, -1)                 # flatten NCHW row-major (torch .view)
    F = x.shape[1]
    H = packed["we0"].shape[1]
    L = eps.shape[1]
    ENC_W = _round_up(3 * L, 128)            # lane-dense [enc|mu|log_var] slab

    # Batch tiling:
    #  * tiny/moderate batches: single block (B rounded up to 8 rows)
    #  * medium batches: exactly 2 grid steps so both v7x TensorCores get work
    #  * large batches: 512-row tiles (~85% of HBM roofline on the x/dec streams)
    B_pad = _round_up(B, 8)
    if B_pad <= 256:
        TB = B_pad
    elif B_pad <= 1024:
        TB = _round_up((B_pad + 1) // 2, 8)
        B_pad = 2 * TB
    else:
        TB = 512
        B_pad = _round_up(B_pad, TB)
    if B_pad != B:
        x = jnp.pad(x, ((0, B_pad - B), (0, 0)))
        eps = jnp.pad(eps, ((0, B_pad - B), (0, 0)))

    kernel = functools.partial(vae_kernel, latent_dim=L)

    row = lambda i: (i, 0)     # batch-tiled
    const = lambda i: (0, 0)   # VMEM-resident weights/biases (DMA'd once)

    encmulv, dec = pl.pallas_call(
        kernel,
        out_shape=(
            jax.ShapeDtypeStruct((B_pad, ENC_W), jnp.float32),   # [enc|mu|lv|pad]
            jax.ShapeDtypeStruct((B_pad, F), jnp.float32),       # decoded
        ),
        grid=(B_pad // TB,),
        in_specs=[
            pl.BlockSpec((TB, F), row),                          # x
            pl.BlockSpec((TB, L), row),                          # eps
            pl.BlockSpec((F, H), const), pl.BlockSpec((1, H), const),       # we0/be0
            pl.BlockSpec((H, H), const), pl.BlockSpec((1, H), const),       # we1/be1
            pl.BlockSpec((H, L), const), pl.BlockSpec((1, L), const),       # we2/be2
            pl.BlockSpec((L, 2 * L), const), pl.BlockSpec((1, 2 * L), const),  # whd/bhd
            pl.BlockSpec((L, H), const), pl.BlockSpec((1, H), const),       # wd0/bd0
            pl.BlockSpec((H, H), const), pl.BlockSpec((1, H), const),       # wd1/bd1
            pl.BlockSpec((H, F), const), pl.BlockSpec((1, F), const),       # wd2/bd2
        ],
        out_specs=[
            pl.BlockSpec((TB, ENC_W), row),
            pl.BlockSpec((TB, F), row),
        ],
        compiler_params=pltpu.CompilerParams(
            dimension_semantics=("parallel",),
            # v5e scoped-VMEM default is 16 MiB; raise it only for big tiles.
            vmem_limit_bytes=(32 << 20) if TB >= 512 else None,
        ),
    )(x, eps,
      packed["we0"], packed["be0"], packed["we1"], packed["be1"],
      packed["we2"], packed["be2"], packed["whd"], packed["bhd"],
      packed["wd0"], packed["bd0"], packed["wd1"], packed["bd1"],
      packed["wd2"], packed["bd2"])

    enc = encmulv[:B, :L]
    mu = encmulv[:B, L:2 * L]
    lv = encmulv[:B, 2 * L:3 * L]
    return enc, dec[:B], mu, lv


def vae_reference(x_img, eps, params):
    """Pure-JAX reference with the same bf16-input / f32-accum matmul precision."""
    f32, bf16 = jnp.float32, jnp.bfloat16

    def mm(a, w):
        return jnp.dot(a.astype(bf16), w.astype(bf16), preferred_element_type=f32)

    B = x_img.shape[0]
    x = x_img.reshape(B, -1)
    h = _relu(mm(x, params["we0"]) + params["be0"])
    h = _relu(mm(h, params["we1"]) + params["be1"])
    enc = _relu(mm(h, params["we2"]) + params["be2"])
    mu = mm(enc, params["wmu"]) + params["bmu"]
    lv = mm(enc, params["wlv"]) + params["blv"]
    z = mu + eps * jnp.exp(0.5 * lv)
    d = _relu(mm(z, params["wd0"]) + params["bd0"])
    d = _relu(mm(d, params["wd1"]) + params["bd1"])
    logits = mm(d, params["wd2"]) + params["bd2"]
    dec = 1.0 / (1.0 + jnp.exp(-logits))
    return enc, dec, mu, lv


if __name__ == "__main__":
    # Synthetic config: C=4, H=W=16 -> input_dim=1024; hidden=32; latent=16; B=2.
    B, C, Himg, Wimg = 2, 4, 16, 16
    input_dim = C * Himg * Wimg
    hidden_dim = 32
    latent_dim = 16

    key = jax.random.PRNGKey(0)
    k_x, k_eps, k_params = jax.random.split(key, 3)

    x_img = jax.random.uniform(k_x, (B, C, Himg, Wimg), jnp.float32)
    # eps drawn outside the kernel (torch uses torch.randn_like(std)); the
    # reparameterize arithmetic itself runs inside the Pallas kernel.
    eps = jax.random.normal(k_eps, (B, latent_dim), jnp.float32)
    params = init_params(k_params, input_dim, hidden_dim, latent_dim)
    packed = pack_params(params)

    enc, dec, mu, lv = vae_forward(x_img, eps, packed)
    jax.block_until_ready((enc, dec, mu, lv))

    # correctness check vs. pure-JAX reference
    enc_r, dec_r, mu_r, lv_r = vae_reference(x_img, eps, params)
    assert jnp.allclose(enc, enc_r, atol=2e-3, rtol=2e-3)
    assert jnp.allclose(mu, mu_r, atol=2e-3, rtol=2e-3)
    assert jnp.allclose(lv, lv_r, atol=2e-3, rtol=2e-3)
    assert jnp.allclose(dec, dec_r, atol=2e-3, rtol=2e-3)
    assert enc.shape == (B, latent_dim) and dec.shape == (B, input_dim)
    assert mu.shape == (B, latent_dim) and lv.shape == (B, latent_dim)

    print("KERNEL_OK")
</pallas_src>

<mosaic_0001>
module attributes {stable_mosaic.version = 11 : i64} {
  func.func @vae_kernel(%arg0: i32, %arg1: memref<8x1024xf32, #tpu.memory_space<vmem>>, %arg2: memref<8x16xf32, #tpu.memory_space<vmem>>, %arg3: memref<1024x32xbf16, #tpu.memory_space<vmem>>, %arg4: memref<1x32xf32, #tpu.memory_space<vmem>>, %arg5: memref<32x32xbf16, #tpu.memory_space<vmem>>, %arg6: memref<1x32xf32, #tpu.memory_space<vmem>>, %arg7: memref<32x16xbf16, #tpu.memory_space<vmem>>, %arg8: memref<1x16xf32, #tpu.memory_space<vmem>>, %arg9: memref<16x32xbf16, #tpu.memory_space<vmem>>, %arg10: memref<1x32xf32, #tpu.memory_space<vmem>>, %arg11: memref<16x32xbf16, #tpu.memory_space<vmem>>, %arg12: memref<1x32xf32, #tpu.memory_space<vmem>>, %arg13: memref<32x32xbf16, #tpu.memory_space<vmem>>, %arg14: memref<1x32xf32, #tpu.memory_space<vmem>>, %arg15: memref<32x1024xbf16, #tpu.memory_space<vmem>>, %arg16: memref<1x1024xf32, #tpu.memory_space<vmem>>, %arg17: memref<8x128xf32, #tpu.memory_space<vmem>>, %arg18: memref<8x1024xf32, #tpu.memory_space<vmem>>) attributes {dimension_semantics = [#tpu.dimension_semantics<parallel>], iteration_bounds = array<i64: 1>, scalar_prefetch = 0 : i64, scratch_operands = 0 : i64, tpu.core_type = #tpu.core_type<tc>, window_params = [{transform_indices = @transform_0, window_bounds = array<i64: 8, 1024>}, {transform_indices = @transform_1, window_bounds = array<i64: 8, 16>}, {pipeline_mode = #tpu.pipeline_mode<synchronous>, transform_indices = @transform_2, window_bounds = array<i64: 1024, 32>}, {pipeline_mode = #tpu.pipeline_mode<synchronous>, transform_indices = @transform_3, window_bounds = array<i64: 1, 32>}, {pipeline_mode = #tpu.pipeline_mode<synchronous>, transform_indices = @transform_4, window_bounds = array<i64: 32, 32>}, {pipeline_mode = #tpu.pipeline_mode<synchronous>, transform_indices = @transform_5, window_bounds = array<i64: 1, 32>}, {pipeline_mode = #tpu.pipeline_mode<synchronous>, transform_indices = @transform_6, window_bounds = array<i64: 32, 16>}, {pipeline_mode = #tpu.pipeline_mode<synchronous>, transform_indices = @transform_7, window_bounds = array<i64: 1, 16>}, {pipeline_mode = #tpu.pipeline_mode<synchronous>, transform_indices = @transform_8, window_bounds = array<i64: 16, 32>}, {pipeline_mode = #tpu.pipeline_mode<synchronous>, transform_indices = @transform_9, window_bounds = array<i64: 1, 32>}, {pipeline_mode = #tpu.pipeline_mode<synchronous>, transform_indices = @transform_10, window_bounds = array<i64: 16, 32>}, {pipeline_mode = #tpu.pipeline_mode<synchronous>, transform_indices = @transform_11, window_bounds = array<i64: 1, 32>}, {pipeline_mode = #tpu.pipeline_mode<synchronous>, transform_indices = @transform_12, window_bounds = array<i64: 32, 32>}, {pipeline_mode = #tpu.pipeline_mode<synchronous>, transform_indices = @transform_13, window_bounds = array<i64: 1, 32>}, {pipeline_mode = #tpu.pipeline_mode<synchronous>, transform_indices = @transform_14, window_bounds = array<i64: 32, 1024>}, {pipeline_mode = #tpu.pipeline_mode<synchronous>, transform_indices = @transform_15, window_bounds = array<i64: 1, 1024>}, {transform_indices = @transform_16, window_bounds = array<i64: 8, 128>}, {transform_indices = @transform_17, window_bounds = array<i64: 8, 1024>}]} {
    %c0 = arith.constant 0 : index
    %c0_0 = arith.constant 0 : index
    %0 = vector.load %arg1[%c0, %c0_0] : memref<8x1024xf32, #tpu.memory_space<vmem>>, vector<8x1024xf32>
    %1 = arith.truncf %0 : vector<8x1024xf32> to vector<8x1024xbf16>
    %c0_1 = arith.constant 0 : index
    %c0_2 = arith.constant 0 : index
    %2 = vector.load %arg3[%c0_1, %c0_2] : memref<1024x32xbf16, #tpu.memory_space<vmem>>, vector<1024x32xbf16>
    %cst = arith.constant dense<0.000000e+00> : vector<8x32xf32>
    %3 = tpu.matmul %1, %2, %cst {dimension_numbers = #tpu.dot_dimension_numbers<[1], [0], [0], [1], [0, 0, 1, 1], [], []>} : vector<8x1024xbf16>, vector<1024x32xbf16>, vector<8x32xf32> -> vector<8x32xf32>
    %c0_3 = arith.constant 0 : index
    %c0_4 = arith.constant 0 : index
    %4 = vector.load %arg4[%c0_3, %c0_4] : memref<1x32xf32, #tpu.memory_space<vmem>>, vector<1x32xf32>
    %5 = vector.broadcast %4 : vector<1x32xf32> to vector<8x32xf32>
    %6 = arith.addf %3, %5 : vector<8x32xf32>
    %cst_5 = arith.constant 0.000000e+00 : f32
    %7 = vector.broadcast %cst_5 : f32 to vector<8x32xf32>
    %8 = arith.maximumf %6, %7 : vector<8x32xf32>
    %9 = arith.truncf %8 : vector<8x32xf32> to vector<8x32xbf16>
    %c0_6 = arith.constant 0 : index
    %c0_7 = arith.constant 0 : index
    %10 = vector.load %arg5[%c0_6, %c0_7] : memref<32x32xbf16, #tpu.memory_space<vmem>>, vector<32x32xbf16>
    %cst_8 = arith.constant dense<0.000000e+00> : vector<8x32xf32>
    %11 = tpu.matmul %9, %10, %cst_8 {dimension_numbers = #tpu.dot_dimension_numbers<[1], [0], [0], [1], [0, 0, 1, 1], [], []>} : vector<8x32xbf16>, vector<32x32xbf16>, vector<8x32xf32> -> vector<8x32xf32>
    %c0_9 = arith.constant 0 : index
    %c0_10 = arith.constant 0 : index
    %12 = vector.load %arg6[%c0_9, %c0_10] : memref<1x32xf32, #tpu.memory_space<vmem>>, vector<1x32xf32>
    %13 = vector.broadcast %12 : vector<1x32xf32> to vector<8x32xf32>
    %14 = arith.addf %11, %13 : vector<8x32xf32>
    %cst_11 = arith.constant 0.000000e+00 : f32
    %15 = vector.broadcast %cst_11 : f32 to vector<8x32xf32>
    %16 = arith.maximumf %14, %15 : vector<8x32xf32>
    %17 = arith.truncf %16 : vector<8x32xf32> to vector<8x32xbf16>
    %c0_12 = arith.constant 0 : index
    %c0_13 = arith.constant 0 : index
    %18 = vector.load %arg7[%c0_12, %c0_13] : memref<32x16xbf16, #tpu.memory_space<vmem>>, vector<32x16xbf16>
    %cst_14 = arith.constant dense<0.000000e+00> : vector<8x16xf32>
    %19 = tpu.matmul %17, %18, %cst_14 {dimension_numbers = #tpu.dot_dimension_numbers<[1], [0], [0], [1], [0, 0, 1, 1], [], []>} : vector<8x32xbf16>, vector<32x16xbf16>, vector<8x16xf32> -> vector<8x16xf32>
    %c0_15 = arith.constant 0 : index
    %c0_16 = arith.constant 0 : index
    %20 = vector.load %arg8[%c0_15, %c0_16] : memref<1x16xf32, #tpu.memory_space<vmem>>, vector<1x16xf32>
    %21 = vector.broadcast %20 : vector<1x16xf32> to vector<8x16xf32>
    %22 = arith.addf %19, %21 : vector<8x16xf32>
    %cst_17 = arith.constant 0.000000e+00 : f32
    %23 = vector.broadcast %cst_17 : f32 to vector<8x16xf32>
    %24 = arith.maximumf %22, %23 : vector<8x16xf32>
    %25 = arith.truncf %24 : vector<8x16xf32> to vector<8x16xbf16>
    %c0_18 = arith.constant 0 : index
    %c0_19 = arith.constant 0 : index
    %26 = vector.load %arg9[%c0_18, %c0_19] : memref<16x32xbf16, #tpu.memory_space<vmem>>, vector<16x32xbf16>
    %cst_20 = arith.constant dense<0.000000e+00> : vector<8x32xf32>
    %27 = tpu.matmul %25, %26, %cst_20 {dimension_numbers = #tpu.dot_dimension_numbers<[1], [0], [0], [1], [0, 0, 1, 1], [], []>} : vector<8x16xbf16>, vector<16x32xbf16>, vector<8x32xf32> -> vector<8x32xf32>
    %c0_21 = arith.constant 0 : index
    %c0_22 = arith.constant 0 : index
    %28 = vector.load %arg10[%c0_21, %c0_22] : memref<1x32xf32, #tpu.memory_space<vmem>>, vector<1x32xf32>
    %29 = vector.broadcast %28 : vector<1x32xf32> to vector<8x32xf32>
    %30 = arith.addf %27, %29 : vector<8x32xf32>
    %31 = vector.extract_strided_slice %30 {offsets = [0, 0], sizes = [8, 16], strides = [1, 1]} : vector<8x32xf32> to vector<8x16xf32>
    %32 = vector.extract_strided_slice %30 {offsets = [0, 16], sizes = [8, 16], strides = [1, 1]} : vector<8x32xf32> to vector<8x16xf32>
    %c0_23 = arith.constant 0 : index
    %c0_24 = arith.constant 0 : index
    %33 = vector.load %arg2[%c0_23, %c0_24] : memref<8x16xf32, #tpu.memory_space<vmem>>, vector<8x16xf32>
    %cst_25 = arith.constant 5.000000e-01 : f32
    %34 = vector.broadcast %cst_25 : f32 to vector<8x16xf32>
    %35 = arith.mulf %34, %32 : vector<8x16xf32>
    %36 = math.exp %35 : vector<8x16xf32>
    %37 = arith.mulf %33, %36 : vector<8x16xf32>
    %38 = arith.addf %31, %37 : vector<8x16xf32>
    %39 = arith.truncf %38 : vector<8x16xf32> to vector<8x16xbf16>
    %c0_26 = arith.constant 0 : index
    %c0_27 = arith.constant 0 : index
    %40 = vector.load %arg11[%c0_26, %c0_27] : memref<16x32xbf16, #tpu.memory_space<vmem>>, vector<16x32xbf16>
    %cst_28 = arith.constant dense<0.000000e+00> : vector<8x32xf32>
    %41 = tpu.matmul %39, %40, %cst_28 {dimension_numbers = #tpu.dot_dimension_numbers<[1], [0], [0], [1], [0, 0, 1, 1], [], []>} : vector<8x16xbf16>, vector<16x32xbf16>, vector<8x32xf32> -> vector<8x32xf32>
    %c0_29 = arith.constant 0 : index
    %c0_30 = arith.constant 0 : index
    %42 = vector.load %arg12[%c0_29, %c0_30] : memref<1x32xf32, #tpu.memory_space<vmem>>, vector<1x32xf32>
    %43 = vector.broadcast %42 : vector<1x32xf32> to vector<8x32xf32>
    %44 = arith.addf %41, %43 : vector<8x32xf32>
    %cst_31 = arith.constant 0.000000e+00 : f32
    %45 = vector.broadcast %cst_31 : f32 to vector<8x32xf32>
    %46 = arith.maximumf %44, %45 : vector<8x32xf32>
    %47 = arith.truncf %46 : vector<8x32xf32> to vector<8x32xbf16>
    %c0_32 = arith.constant 0 : index
    %c0_33 = arith.constant 0 : index
    %48 = vector.load %arg13[%c0_32, %c0_33] : memref<32x32xbf16, #tpu.memory_space<vmem>>, vector<32x32xbf16>
    %cst_34 = arith.constant dense<0.000000e+00> : vector<8x32xf32>
    %49 = tpu.matmul %47, %48, %cst_34 {dimension_numbers = #tpu.dot_dimension_numbers<[1], [0], [0], [1], [0, 0, 1, 1], [], []>} : vector<8x32xbf16>, vector<32x32xbf16>, vector<8x32xf32> -> vector<8x32xf32>
    %c0_35 = arith.constant 0 : index
    %c0_36 = arith.constant 0 : index
    %50 = vector.load %arg14[%c0_35, %c0_36] : memref<1x32xf32, #tpu.memory_space<vmem>>, vector<1x32xf32>
    %51 = vector.broadcast %50 : vector<1x32xf32> to vector<8x32xf32>
    %52 = arith.addf %49, %51 : vector<8x32xf32>
    %cst_37 = arith.constant 0.000000e+00 : f32
    %53 = vector.broadcast %cst_37 : f32 to vector<8x32xf32>
    %54 = arith.maximumf %52, %53 : vector<8x32xf32>
    %55 = arith.truncf %54 : vector<8x32xf32> to vector<8x32xbf16>
    %c0_38 = arith.constant 0 : index
    %c0_39 = arith.constant 0 : index
    %56 = vector.load %arg15[%c0_38, %c0_39] : memref<32x1024xbf16, #tpu.memory_space<vmem>>, vector<32x1024xbf16>
    %cst_40 = arith.constant dense<0.000000e+00> : vector<8x1024xf32>
    %57 = tpu.matmul %55, %56, %cst_40 {dimension_numbers = #tpu.dot_dimension_numbers<[1], [0], [0], [1], [0, 0, 1, 1], [], []>} : vector<8x32xbf16>, vector<32x1024xbf16>, vector<8x1024xf32> -> vector<8x1024xf32>
    %c0_41 = arith.constant 0 : index
    %c0_42 = arith.constant 0 : index
    %58 = vector.load %arg16[%c0_41, %c0_42] : memref<1x1024xf32, #tpu.memory_space<vmem>>, vector<1x1024xf32>
    %59 = vector.broadcast %58 : vector<1x1024xf32> to vector<8x1024xf32>
    %60 = arith.addf %57, %59 : vector<8x1024xf32>
    %cst_43 = arith.constant 5.000000e-01 : f32
    %61 = vector.broadcast %cst_43 : f32 to vector<8x1024xf32>
    %62 = arith.mulf %61, %60 : vector<8x1024xf32>
    %63 = math.tanh %62 : vector<8x1024xf32>
    %cst_44 = arith.constant 5.000000e-01 : f32
    %64 = vector.broadcast %cst_44 : f32 to vector<8x1024xf32>
    %65 = arith.mulf %64, %63 : vector<8x1024xf32>
    %cst_45 = arith.constant 5.000000e-01 : f32
    %66 = vector.broadcast %cst_45 : f32 to vector<8x1024xf32>
    %67 = arith.addf %65, %66 : vector<8x1024xf32>
    %c0_46 = arith.constant 0 : index
    %c0_47 = arith.constant 0 : index
    %68 = vector.load %arg18[%c0_46, %c0_47] : memref<8x1024xf32, #tpu.memory_space<vmem>>, vector<8x1024xf32>
    tpu.vector_store %arg18[%c0_46, %c0_47], %67 {strides = array<i32>} : memref<8x1024xf32, #tpu.memory_space<vmem>>, vector<8x1024xf32>,
    %c0_48 = arith.constant 0 : index
    %c0_49 = arith.constant 0 : index
    %69 = vector.load %arg17[%c0_48, %c0_49] : memref<8x128xf32, #tpu.memory_space<vmem>>, vector<8x16xf32>
    tpu.vector_store %arg17[%c0_48, %c0_49], %24 {strides = array<i32>} : memref<8x128xf32, #tpu.memory_space<vmem>>, vector<8x16xf32>,
    %c0_50 = arith.constant 0 : index
    %c16 = arith.constant 16 : index
    %70 = vector.load %arg17[%c0_50, %c16] : memref<8x128xf32, #tpu.memory_space<vmem>>, vector<8x32xf32>
    tpu.vector_store %arg17[%c0_50, %c16], %30 {strides = array<i32>} : memref<8x128xf32, #tpu.memory_space<vmem>>, vector<8x32xf32>,
    %cst_51 = arith.constant 0.000000e+00 : f32
    %71 = vector.broadcast %cst_51 : f32 to vector<8x80xf32>
    %c0_52 = arith.constant 0 : index
    %c48 = arith.constant 48 : index
    %72 = vector.load %arg17[%c0_52, %c48] : memref<8x128xf32, #tpu.memory_space<vmem>>, vector<8x80xf32>
    tpu.vector_store %arg17[%c0_52, %c48], %71 {strides = array<i32>} : memref<8x128xf32, #tpu.memory_space<vmem>>, vector<8x80xf32>,
    return
  }
  func.func @transform_0(%arg0: i32) -> (i32, i32) {
    %c0_i32 = arith.constant 0 : i32
    %c0_i32_0 = arith.constant 0 : i32
    return %arg0, %c0_i32 : i32, i32
  }
  func.func @transform_1(%arg0: i32) -> (i32, i32) {
    %c0_i32 = arith.constant 0 : i32
    %c0_i32_0 = arith.constant 0 : i32
    return %arg0, %c0_i32 : i32, i32
  }
  func.func @transform_2(%arg0: i32) -> (i32, i32) {
    %c0_i32 = arith.constant 0 : i32
    %c0_i32_0 = arith.constant 0 : i32
    %c0_i32_1 = arith.constant 0 : i32
    return %c0_i32, %c0_i32_0 : i32, i32
  }
  func.func @transform_3(%arg0: i32) -> (i32, i32) {
    %c0_i32 = arith.constant 0 : i32
    %c0_i32_0 = arith.constant 0 : i32
    %c0_i32_1 = arith.constant 0 : i32
    return %c0_i32, %c0_i32_0 : i32, i32
  }
  func.func @transform_4(%arg0: i32) -> (i32, i32) {
    %c0_i32 = arith.constant 0 : i32
    %c0_i32_0 = arith.constant 0 : i32
    %c0_i32_1 = arith.constant 0 : i32
    return %c0_i32, %c0_i32_0 : i32, i32
  }
  func.func @transform_5(%arg0: i32) -> (i32, i32) {
    %c0_i32 = arith.constant 0 : i32
    %c0_i32_0 = arith.constant 0 : i32
    %c0_i32_1 = arith.constant 0 : i32
    return %c0_i32, %c0_i32_0 : i32, i32
  }
  func.func @transform_6(%arg0: i32) -> (i32, i32) {
    %c0_i32 = arith.constant 0 : i32
    %c0_i32_0 = arith.constant 0 : i32
    %c0_i32_1 = arith.constant 0 : i32
    return %c0_i32, %c0_i32_0 : i32, i32
  }
  func.func @transform_7(%arg0: i32) -> (i32, i32) {
    %c0_i32 = arith.constant 0 : i32
    %c0_i32_0 = arith.constant 0 : i32
    %c0_i32_1 = arith.constant 0 : i32
    return %c0_i32, %c0_i32_0 : i32, i32
  }
  func.func @transform_8(%arg0: i32) -> (i32, i32) {
    %c0_i32 = arith.constant 0 : i32
    %c0_i32_0 = arith.constant 0 : i32
    %c0_i32_1 = arith.constant 0 : i32
    return %c0_i32, %c0_i32_0 : i32, i32
  }
  func.func @transform_9(%arg0: i32) -> (i32, i32) {
    %c0_i32 = arith.constant 0 : i32
    %c0_i32_0 = arith.constant 0 : i32
    %c0_i32_1 = arith.constant 0 : i32
    return %c0_i32, %c0_i32_0 : i32, i32
  }
  func.func @transform_10(%arg0: i32) -> (i32, i32) {
    %c0_i32 = arith.constant 0 : i32
    %c0_i32_0 = arith.constant 0 : i32
    %c0_i32_1 = arith.constant 0 : i32
    return %c0_i32, %c0_i32_0 : i32, i32
  }
  func.func @transform_11(%arg0: i32) -> (i32, i32) {
    %c0_i32 = arith.constant 0 : i32
    %c0_i32_0 = arith.constant 0 : i32
    %c0_i32_1 = arith.constant 0 : i32
    return %c0_i32, %c0_i32_0 : i32, i32
  }
  func.func @transform_12(%arg0: i32) -> (i32, i32) {
    %c0_i32 = arith.constant 0 : i32
    %c0_i32_0 = arith.constant 0 : i32
    %c0_i32_1 = arith.constant 0 : i32
    return %c0_i32, %c0_i32_0 : i32, i32
  }
  func.func @transform_13(%arg0: i32) -> (i32, i32) {
    %c0_i32 = arith.constant 0 : i32
    %c0_i32_0 = arith.constant 0 : i32
    %c0_i32_1 = arith.constant 0 : i32
    return %c0_i32, %c0_i32_0 : i32, i32
  }
  func.func @transform_14(%arg0: i32) -> (i32, i32) {
    %c0_i32 = arith.constant 0 : i32
    %c0_i32_0 = arith.constant 0 : i32
    %c0_i32_1 = arith.constant 0 : i32
    return %c0_i32, %c0_i32_0 : i32, i32
  }
  func.func @transform_15(%arg0: i32) -> (i32, i32) {
    %c0_i32 = arith.constant 0 : i32
    %c0_i32_0 = arith.constant 0 : i32
    %c0_i32_1 = arith.constant 0 : i32
    return %c0_i32, %c0_i32_0 : i32, i32
  }
  func.func @transform_16(%arg0: i32) -> (i32, i32) {
    %c0_i32 = arith.constant 0 : i32
    %c0_i32_0 = arith.constant 0 : i32
    return %arg0, %c0_i32 : i32, i32
  }
  func.func @transform_17(%arg0: i32) -> (i32, i32) {
    %c0_i32 = arith.constant 0 : i32
    %c0_i32_0 = arith.constant 0 : i32
    return %arg0, %c0_i32 : i32, i32
  }
}

</mosaic_0001>

<llo_original>
// kernel: vae_forward.1
$region0: #{vae_forward.1}
  #allocation0 [shape = 'u32[]', space=smem, size = 0x4, offset = 0x4, fixed_abs, tag = 'smem constant byte address 0x4 - core index']
  #allocation1 [shape = 'u32[72,128]{1,0:T(1,128)}', space=vmem, size = 0x9000, scoped, tag = 'internal scratch']
  %s0 = inlined_call_operand.vmem [shape: f32[8,1024], index: 0, kind: input, shape index: {}]
  %s1 = inlined_call_operand.vmem [shape: f32[8,16], index: 1, kind: input, shape index: {}]
  %s2 = inlined_call_operand.vmem [shape: bf16[1024,32], index: 2, kind: input, shape index: {}]
  %s3 = inlined_call_operand.vmem [shape: f32[1,32], index: 3, kind: input, shape index: {}]
  %s4 = inlined_call_operand.vmem [shape: bf16[32,32], index: 4, kind: input, shape index: {}]
  %s5 = inlined_call_operand.vmem [shape: f32[1,32], index: 5, kind: input, shape index: {}]
  %s6 = inlined_call_operand.vmem [shape: bf16[32,16], index: 6, kind: input, shape index: {}]
  %s7 = inlined_call_operand.vmem [shape: f32[1,16], index: 7, kind: input, shape index: {}]
  %s8 = inlined_call_operand.vmem [shape: bf16[16,32], index: 8, kind: input, shape index: {}]
  %s9 = inlined_call_operand.vmem [shape: f32[1,32], index: 9, kind: input, shape index: {}]
  %s10 = inlined_call_operand.vmem [shape: bf16[16,32], index: 10, kind: input, shape index: {}]
  %s11 = inlined_call_operand.vmem [shape: f32[1,32], index: 11, kind: input, shape index: {}]
  %s12 = inlined_call_operand.vmem [shape: bf16[32,32], index: 12, kind: input, shape index: {}]
  %s13 = inlined_call_operand.vmem [shape: f32[1,32], index: 13, kind: input, shape index: {}]
  %s14 = inlined_call_operand.vmem [shape: bf16[32,1024], index: 14, kind: input, shape index: {}]
  %s15 = inlined_call_operand.vmem [shape: f32[1,1024], index: 15, kind: input, shape index: {}]
  %s16 = inlined_call_operand.vmem [shape: f32[8,128], index: 16, kind: output, shape index: {0}]
  %s17 = inlined_call_operand.vmem [shape: f32[8,1024], index: 17, kind: output, shape index: {1}]
  %18 = xla_tuple %s16, %s17
  %s19 = sld [smem:[#allocation0]]
  $region82: #{vae_forward.1} parent=0
    _
  %s21 = ssub.s32 1, %s19
  %s22 = scalar_select 0, %s21, %s19
  // Predicated region
  $region2: #{vae_forward.1} parent=0 // pred_check
    _
  $region3: #{vae_forward.1} parent=0 // pred_check_branch
    %24 = sbr.rel (0) target = $region5
  $region4: #{vae_forward.1} parent=0 // pred_region
    _
  $region5: #{vae_forward.1} parent=0 // pred_fallthru
    _
  // Predicated region
  $region6: #{vae_forward.1} parent=0 // pred_check
    _
  $region7: #{vae_forward.1} parent=0 // pred_check_branch
    %26 = sbr.rel (0) target = $region9
  $region8: #{vae_forward.1} parent=0 // pred_region
    _
  $region9: #{vae_forward.1} parent=0 // pred_fallthru
    _
  // Predicated region
  $region10: #{vae_forward.1} parent=0 // pred_check
    _
  $region11: #{vae_forward.1} parent=0 // pred_check_branch
    %28 = sbr.rel (0) target = $region13
  $region12: #{vae_forward.1} parent=0 // pred_region
    _
  $region13: #{vae_forward.1} parent=0 // pred_fallthru
    _
  // Predicated region
  $region14: #{vae_forward.1} parent=0 // pred_check
    _
  $region15: #{vae_forward.1} parent=0 // pred_check_branch
    %30 = sbr.rel (0) target = $region17
  $region16: #{vae_forward.1} parent=0 // pred_region
    _
  $region17: #{vae_forward.1} parent=0 // pred_fallthru
    _
  // Predicated region
  $region18: #{vae_forward.1} parent=0 // pred_check
    _
  $region19: #{vae_forward.1} parent=0 // pred_check_branch
    %32 = sbr.rel (0) target = $region21
  $region20: #{vae_forward.1} parent=0 // pred_region
    _
  $region21: #{vae_forward.1} parent=0 // pred_fallthru
    _
  // Predicated region
  $region22: #{vae_forward.1} parent=0 // pred_check
    _
  $region23: #{vae_forward.1} parent=0 // pred_check_branch
    %34 = sbr.rel (0) target = $region25
  $region24: #{vae_forward.1} parent=0 // pred_region
    _
  $region25: #{vae_forward.1} parent=0 // pred_fallthru
    _
  // Predicated region
  $region26: #{vae_forward.1} parent=0 // pred_check
    _
  $region27: #{vae_forward.1} parent=0 // pred_check_branch
    %36 = sbr.rel (0) target = $region29
  $region28: #{vae_forward.1} parent=0 // pred_region
    _
  $region29: #{vae_forward.1} parent=0 // pred_fallthru
    _
  // Predicated region
  $region30: #{vae_forward.1} parent=0 // pred_check
    _
  $region31: #{vae_forward.1} parent=0 // pred_check_branch
    %38 = sbr.rel (0) target = $region33
  $region32: #{vae_forward.1} parent=0 // pred_region
    _
  $region33: #{vae_forward.1} parent=0 // pred_fallthru
    _
  // Predicated region
  $region34: #{vae_forward.1} parent=0 // pred_check
    _
  $region35: #{vae_forward.1} parent=0 // pred_check_branch
    %40 = sbr.rel (0) target = $region37
  $region36: #{vae_forward.1} parent=0 // pred_region
    _
  $region37: #{vae_forward.1} parent=0 // pred_fallthru
    _
  // Predicated region
  $region38: #{vae_forward.1} parent=0 // pred_check
    _
  $region39: #{vae_forward.1} parent=0 // pred_check_branch
    %42 = sbr.rel (0) target = $region41
  $region40: #{vae_forward.1} parent=0 // pred_region
    _
  $region41: #{vae_forward.1} parent=0 // pred_fallthru
    _
  // Predicated region
  $region42: #{vae_forward.1} parent=0 // pred_check
    _
  $region43: #{vae_forward.1} parent=0 // pred_check_branch
    %44 = sbr.rel (0) target = $region45
  $region44: #{vae_forward.1} parent=0 // pred_region
    _
  $region45: #{vae_forward.1} parent=0 // pred_fallthru
    _
  // Predicated region
  $region46: #{vae_forward.1} parent=0 // pred_check
    _
  $region47: #{vae_forward.1} parent=0 // pred_check_branch
    %46 = sbr.rel (0) target = $region49
  $region48: #{vae_forward.1} parent=0 // pred_region
    _
  $region49: #{vae_forward.1} parent=0 // pred_fallthru
    _
  // Predicated region
  $region50: #{vae_forward.1} parent=0 // pred_check
    _
  $region51: #{vae_forward.1} parent=0 // pred_check_branch
    %48 = sbr.rel (0) target = $region53
  $region52: #{vae_forward.1} parent=0 // pred_region
    _
  $region53: #{vae_forward.1} parent=0 // pred_fallthru
    _
  // Predicated region
  $region54: #{vae_forward.1} parent=0 // pred_check
    _
  $region55: #{vae_forward.1} parent=0 // pred_check_branch
    %50 = sbr.rel (0) target = $region57
  $region56: #{vae_forward.1} parent=0 // pred_region
    _
  $region57: #{vae_forward.1} parent=0 // pred_fallthru
    _
  // Predicated region
  $region58: #{vae_forward.1} parent=0 // pred_check
    _
  $region59: #{vae_forward.1} parent=0 // pred_check_branch
    %52 = sbr.rel (0) target = $region61
  $region60: #{vae_forward.1} parent=0 // pred_region
    _
  $region61: #{vae_forward.1} parent=0 // pred_fallthru
    _
  // Predicated region
  $region62: #{vae_forward.1} parent=0 // pred_check
    _
  $region63: #{vae_forward.1} parent=0 // pred_check_branch
    %54 = sbr.rel (0) target = $region65
  $region64: #{vae_forward.1} parent=0 // pred_region
    _
  $region65: #{vae_forward.1} parent=0 // pred_fallthru
    _
  %v56 = vld [vmem:[%s0] sm:$0xff]
  %v57 = vld [vmem:[%s0 + $0x8] sm:$0xff]
  %v58 = vld [vmem:[%s0 + $0x10] sm:$0xff]
  %v59 = vld [vmem:[%s0 + $0x18] sm:$0xff]
  %v60 = vld [vmem:[%s0 + $0x20] sm:$0xff]
  %v61 = vld [vmem:[%s0 + $0x28] sm:$0xff]
  %v62 = vld [vmem:[%s0 + $0x30] sm:$0xff]
  %v63 = vld [vmem:[%s0 + $0x38] sm:$0xff]
  %v64 = vpack.c.bf16 %v56, %v56
  %v65 = vpack.c.bf16 %v57, %v57
  %v66 = vpack.c.bf16 %v58, %v58
  %v67 = vpack.c.bf16 %v59, %v59
  %v68 = vpack.c.bf16 %v60, %v60
  %v69 = vpack.c.bf16 %v61, %v61
  %v70 = vpack.c.bf16 %v62, %v62
  %v71 = vpack.c.bf16 %v63, %v63
  %v72 = vld [vmem:[%s2] sm:$0xf]
  %v73 = vld [vmem:[%s2 + $0x4] sm:$0xf]
  %v74 = vld [vmem:[%s2 + $0x8] sm:$0xf]
  %v75 = vld [vmem:[%s2 + $0xc] sm:$0xf]
  %v76 = vld [vmem:[%s2 + $0x10] sm:$0xf]
  %v77 = vld [vmem:[%s2 + $0x14] sm:$0xf]
  %v78 = vld [vmem:[%s2 + $0x18] sm:$0xf]
  %v79 = vld [vmem:[%s2 + $0x1c] sm:$0xf]
  %v80 = vld [vmem:[%s2 + $0x20] sm:$0xf]
  %v81 = vld [vmem:[%s2 + $0x24] sm:$0xf]
  %v82 = vld [vmem:[%s2 + $0x28] sm:$0xf]
  %v83 = vld [vmem:[%s2 + $0x2c] sm:$0xf]
  %v84 = vld [vmem:[%s2 + $0x30] sm:$0xf]
  %v85 = vld [vmem:[%s2 + $0x34] sm:$0xf]
  %v86 = vld [vmem:[%s2 + $0x38] sm:$0xf]
  %v87 = vld [vmem:[%s2 + $0x3c] sm:$0xf]
  %v88 = vld [vmem:[%s2 + $0x40] sm:$0xf]
  %v89 = vld [vmem:[%s2 + $0x44] sm:$0xf]
  %v90 = vld [vmem:[%s2 + $0x48] sm:$0xf]
  %v91 = vld [vmem:[%s2 + $0x4c] sm:$0xf]
  %v92 = vld [vmem:[%s2 + $0x50] sm:$0xf]
  %v93 = vld [vmem:[%s2 + $0x54] sm:$0xf]
  %v94 = vld [vmem:[%s2 + $0x58] sm:$0xf]
  %v95 = vld [vmem:[%s2 + $0x5c] sm:$0xf]
  %v96 = vld [vmem:[%s2 + $0x60] sm:$0xf]
  %v97 = vld [vmem:[%s2 + $0x64] sm:$0xf]
  %v98 = vld [vmem:[%s2 + $0x68] sm:$0xf]
  %v99 = vld [vmem:[%s2 + $0x6c] sm:$0xf]
  %v100 = vld [vmem:[%s2 + $0x70] sm:$0xf]
  %v101 = vld [vmem:[%s2 + $0x74] sm:$0xf]
  %v102 = vld [vmem:[%s2 + $0x78] sm:$0xf]
  %v103 = vld [vmem:[%s2 + $0x7c] sm:$0xf]
  %v104 = vld [vmem:[%s2 + $0x80] sm:$0xf]
  %v105 = vld [vmem:[%s2 + $0x84] sm:$0xf]
  %v106 = vld [vmem:[%s2 + $0x88] sm:$0xf]
  %v107 = vld [vmem:[%s2 + $0x8c] sm:$0xf]
  %v108 = vld [vmem:[%s2 + $0x90] sm:$0xf]
  %v109 = vld [vmem:[%s2 + $0x94] sm:$0xf]
  %v110 = vld [vmem:[%s2 + $0x98] sm:$0xf]
  %v111 = vld [vmem:[%s2 + $0x9c] sm:$0xf]
  %v112 = vld [vmem:[%s2 + $0xa0] sm:$0xf]
  %v113 = vld [vmem:[%s2 + $0xa4] sm:$0xf]
  %v114 = vld [vmem:[%s2 + $0xa8] sm:$0xf]
  %v115 = vld [vmem:[%s2 + $0xac] sm:$0xf]
  %v116 = vld [vmem:[%s2 + $0xb0] sm:$0xf]
  %v117 = vld [vmem:[%s2 + $0xb4] sm:$0xf]
  %v118 = vld [vmem:[%s2 + $0xb8] sm:$0xf]
  %v119 = vld [vmem:[%s2 + $0xbc] sm:$0xf]
  %v120 = vld [vmem:[%s2 + $0xc0] sm:$0xf]
  %v121 = vld [vmem:[%s2 + $0xc4] sm:$0xf]
  %v122 = vld [vmem:[%s2 + $0xc8] sm:$0xf]
  %v123 = vld [vmem:[%s2 + $0xcc] sm:$0xf]
  %v124 = vld [vmem:[%s2 + $0xd0] sm:$0xf]
  %v125 = vld [vmem:[%s2 + $0xd4] sm:$0xf]
  %v126 = vld [vmem:[%s2 + $0xd8] sm:$0xf]
  %v127 = vld [vmem:[%s2 + $0xdc] sm:$0xf]
  %v128 = vld [vmem:[%s2 + $0xe0] sm:$0xf]
  %v129 = vld [vmem:[%s2 + $0xe4] sm:$0xf]
  %v130 = vld [vmem:[%s2 + $0xe8] sm:$0xf]
  %v131 = vld [vmem:[%s2 + $0xec] sm:$0xf]
  %v132 = vld [vmem:[%s2 + $0xf0] sm:$0xf]
  %v133 = vld [vmem:[%s2 + $0xf4] sm:$0xf]
  %v134 = vld [vmem:[%s2 + $0xf8] sm:$0xf]
  %v135 = vld [vmem:[%s2 + $0xfc] sm:$0xf]
  %v136 = vld [vmem:[%s2 + $0x100] sm:$0xf]
  %v137 = vld [vmem:[%s2 + $0x104] sm:$0xf]
  %v138 = vld [vmem:[%s2 + $0x108] sm:$0xf]
  %v139 = vld [vmem:[%s2 + $0x10c] sm:$0xf]
  %v140 = vld [vmem:[%s2 + $0x110] sm:$0xf]
  %v141 = vld [vmem:[%s2 + $0x114] sm:$0xf]
  %v142 = vld [vmem:[%s2 + $0x118] sm:$0xf]
  %v143 = vld [vmem:[%s2 + $0x11c] sm:$0xf]
  %v144 = vld [vmem:[%s2 + $0x120] sm:$0xf]
  %v145 = vld [vmem:[%s2 + $0x124] sm:$0xf]
  %v146 = vld [vmem:[%s2 + $0x128] sm:$0xf]
  %v147 = vld [vmem:[%s2 + $0x12c] sm:$0xf]
  %v148 = vld [vmem:[%s2 + $0x130] sm:$0xf]
  %v149 = vld [vmem:[%s2 + $0x134] sm:$0xf]
  %v150 = vld [vmem:[%s2 + $0x138] sm:$0xf]
  %v151 = vld [vmem:[%s2 + $0x13c] sm:$0xf]
  %v152 = vld [vmem:[%s2 + $0x140] sm:$0xf]
  %v153 = vld [vmem:[%s2 + $0x144] sm:$0xf]
  %v154 = vld [vmem:[%s2 + $0x148] sm:$0xf]
  %v155 = vld [vmem:[%s2 + $0x14c] sm:$0xf]
  %v156 = vld [vmem:[%s2 + $0x150] sm:$0xf]
  %v157 = vld [vmem:[%s2 + $0x154] sm:$0xf]
  %v158 = vld [vmem:[%s2 + $0x158] sm:$0xf]
  %v159 = vld [vmem:[%s2 + $0x15c] sm:$0xf]
  %v160 = vld [vmem:[%s2 + $0x160] sm:$0xf]
  %v161 = vld [vmem:[%s2 + $0x164] sm:$0xf]
  %v162 = vld [vmem:[%s2 + $0x168] sm:$0xf]
  %v163 = vld [vmem:[%s2 + $0x16c] sm:$0xf]
  %v164 = vld [vmem:[%s2 + $0x170] sm:$0xf]
  %v165 = vld [vmem:[%s2 + $0x174] sm:$0xf]
  %v166 = vld [vmem:[%s2 + $0x178] sm:$0xf]
  %v167 = vld [vmem:[%s2 + $0x17c] sm:$0xf]
  %v168 = vld [vmem:[%s2 + $0x180] sm:$0xf]
  %v169 = vld [vmem:[%s2 + $0x184] sm:$0xf]
  %v170 = vld [vmem:[%s2 + $0x188] sm:$0xf]
  %v171 = vld [vmem:[%s2 + $0x18c] sm:$0xf]
  %v172 = vld [vmem:[%s2 + $0x190] sm:$0xf]
  %v173 = vld [vmem:[%s2 + $0x194] sm:$0xf]
  %v174 = vld [vmem:[%s2 + $0x198] sm:$0xf]
  %v175 = vld [vmem:[%s2 + $0x19c] sm:$0xf]
  %v176 = vld [vmem:[%s2 + $0x1a0] sm:$0xf]
  %v177 = vld [vmem:[%s2 + $0x1a4] sm:$0xf]
  %v178 = vld [vmem:[%s2 + $0x1a8] sm:$0xf]
  %v179 = vld [vmem:[%s2 + $0x1ac] sm:$0xf]
  %v180 = vld [vmem:[%s2 + $0x1b0] sm:$0xf]
  %v181 = vld [vmem:[%s2 + $0x1b4] sm:$0xf]
  %v182 = vld [vmem:[%s2 + $0x1b8] sm:$0xf]
  %v183 = vld [vmem:[%s2 + $0x1bc] sm:$0xf]
  %v184 = vld [vmem:[%s2 + $0x1c0] sm:$0xf]
  %v185 = vld [vmem:[%s2 + $0x1c4] sm:$0xf]
  %v186 = vld [vmem:[%s2 + $0x1c8] sm:$0xf]
  %v187 = vld [vmem:[%s2 + $0x1cc] sm:$0xf]
  %v188 = vld [vmem:[%s2 + $0x1d0] sm:$0xf]
  %v189 = vld [vmem:[%s2 + $0x1d4] sm:$0xf]
  %v190 = vld [vmem:[%s2 + $0x1d8] sm:$0xf]
  %v191 = vld [vmem:[%s2 + $0x1dc] sm:$0xf]
  %v192 = vld [vmem:[%s2 + $0x1e0] sm:$0xf]
  %v193 = vld [vmem:[%s2 + $0x1e4] sm:$0xf]
  %v194 = vld [vmem:[%s2 + $0x1e8] sm:$0xf]
  %v195 = vld [vmem:[%s2 + $0x1ec] sm:$0xf]
  %v196 = vld [vmem:[%s2 + $0x1f0] sm:$0xf]
  %v197 = vld [vmem:[%s2 + $0x1f4] sm:$0xf]
  %v198 = vld [vmem:[%s2 + $0x1f8] sm:$0xf]
  %v199 = vld [vmem:[%s2 + $0x1fc] sm:$0xf]
  %v200 = vld [vmem:[%s3] sm:$0x1]
  %v202 = vperm.slane %v200, 0
  %v332 = vunpack.c.l.b16 %v72
  %v333 = vunpack.c.l.b16 %v73
  %v334 = vunpack.c.l.b16 %v74
  %v335 = vunpack.c.l.b16 %v75
  %v336 = vunpack.c.l.b16 %v76
  %v337 = vunpack.c.l.b16 %v77
  %v338 = vunpack.c.l.b16 %v78
  %v339 = vunpack.c.l.b16 %v79
  %v340 = vunpack.c.l.b16 %v80
  %v341 = vunpack.c.l.b16 %v81
  %v342 = vunpack.c.l.b16 %v82
  %v343 = vunpack.c.l.b16 %v83
  %v344 = vunpack.c.l.b16 %v84
  %v345 = vunpack.c.l.b16 %v85
  %v346 = vunpack.c.l.b16 %v86
  %v347 = vunpack.c.l.b16 %v87
  %v348 = vunpack.c.l.b16 %v88
  %v349 = vunpack.c.l.b16 %v89
  %v350 = vunpack.c.l.b16 %v90
  %v351 = vunpack.c.l.b16 %v91
  %v352 = vunpack.c.l.b16 %v92
  %v353 = vunpack.c.l.b16 %v93
  %v354 = vunpack.c.l.b16 %v94
  %v355 = vunpack.c.l.b16 %v95
  %v356 = vunpack.c.l.b16 %v96
  %v357 = vunpack.c.l.b16 %v97
  %v358 = vunpack.c.l.b16 %v98
  %v359 = vunpack.c.l.b16 %v99
  %v360 = vunpack.c.l.b16 %v100
  %v361 = vunpack.c.l.b16 %v101
  %v362 = vunpack.c.l.b16 %v102
  %v363 = vunpack.c.l.b16 %v103
  %v364 = vunpack.c.l.b16 %v104
  %v365 = vunpack.c.l.b16 %v105
  %v366 = vunpack.c.l.b16 %v106
  %v367 = vunpack.c.l.b16 %v107
  %v368 = vunpack.c.l.b16 %v108
  %v369 = vunpack.c.l.b16 %v109
  %v370 = vunpack.c.l.b16 %v110
  %v371 = vunpack.c.l.b16 %v111
  %v372 = vunpack.c.l.b16 %v112
  %v373 = vunpack.c.l.b16 %v113
  %v374 = vunpack.c.l.b16 %v114
  %v375 = vunpack.c.l.b16 %v115
  %v376 = vunpack.c.l.b16 %v116
  %v377 = vunpack.c.l.b16 %v117
  %v378 = vunpack.c.l.b16 %v118
  %v379 = vunpack.c.l.b16 %v119
  %v380 = vunpack.c.l.b16 %v120
  %v381 = vunpack.c.l.b16 %v121
  %v382 = vunpack.c.l.b16 %v122
  %v383 = vunpack.c.l.b16 %v123
  %v384 = vunpack.c.l.b16 %v124
  %v385 = vunpack.c.l.b16 %v125
  %v386 = vunpack.c.l.b16 %v126
  %v387 = vunpack.c.l.b16 %v127
  %v388 = vunpack.c.l.b16 %v128
  %v389 = vunpack.c.l.b16 %v129
  %v390 = vunpack.c.l.b16 %v130
  %v391 = vunpack.c.l.b16 %v131
  %v392 = vunpack.c.l.b16 %v132
  %v393 = vunpack.c.l.b16 %v133
  %v394 = vunpack.c.l.b16 %v134
  %v395 = vunpack.c.l.b16 %v135
  %v396 = vunpack.c.l.b16 %v136
  %v397 = vunpack.c.l.b16 %v137
  %v398 = vunpack.c.l.b16 %v138
  %v399 = vunpack.c.l.b16 %v139
  %v400 = vunpack.c.l.b16 %v140
  %v401 = vunpack.c.l.b16 %v141
  %v402 = vunpack.c.l.b16 %v142
  %v403 = vunpack.c.l.b16 %v143
  %v404 = vunpack.c.l.b16 %v144
  %v405 = vunpack.c.l.b16 %v145
  %v406 = vunpack.c.l.b16 %v146
  %v407 = vunpack.c.l.b16 %v147
  %v408 = vunpack.c.l.b16 %v148
  %v409 = vunpack.c.l.b16 %v149
  %v410 = vunpack.c.l.b16 %v150
  %v411 = vunpack.c.l.b16 %v151
  %v412 = vunpack.c.l.b16 %v152
  %v413 = vunpack.c.l.b16 %v153
  %v414 = vunpack.c.l.b16 %v154
  %v415 = vunpack.c.l.b16 %v155
  %v416 = vunpack.c.l.b16 %v156
  %v417 = vunpack.c.l.b16 %v157
  %v418 = vunpack.c.l.b16 %v158
  %v419 = vunpack.c.l.b16 %v159
  %v420 = vunpack.c.l.b16 %v160
  %v421 = vunpack.c.l.b16 %v161
  %v422 = vunpack.c.l.b16 %v162
  %v423 = vunpack.c.l.b16 %v163
  %v424 = vunpack.c.l.b16 %v164
  %v425 = vunpack.c.l.b16 %v165
  %v426 = vunpack.c.l.b16 %v166
  %v427 = vunpack.c.l.b16 %v167
  %v428 = vunpack.c.l.b16 %v168
  %v429 = vunpack.c.l.b16 %v169
  %v430 = vunpack.c.l.b16 %v170
  %v431 = vunpack.c.l.b16 %v171
  %v432 = vunpack.c.l.b16 %v172
  %v433 = vunpack.c.l.b16 %v173
  %v434 = vunpack.c.l.b16 %v174
  %v435 = vunpack.c.l.b16 %v175
  %v436 = vunpack.c.l.b16 %v176
  %v437 = vunpack.c.l.b16 %v177
  %v438 = vunpack.c.l.b16 %v178
  %v439 = vunpack.c.l.b16 %v179
  %v440 = vunpack.c.l.b16 %v180
  %v441 = vunpack.c.l.b16 %v181
  %v442 = vunpack.c.l.b16 %v182
  %v443 = vunpack.c.l.b16 %v183
  %v444 = vunpack.c.l.b16 %v184
  %v445 = vunpack.c.l.b16 %v185
  %v446 = vunpack.c.l.b16 %v186
  %v447 = vunpack.c.l.b16 %v187
  %v448 = vunpack.c.l.b16 %v188
  %v449 = vunpack.c.l.b16 %v189
  %v450 = vunpack.c.l.b16 %v190
  %v451 = vunpack.c.l.b16 %v191
  %v452 = vunpack.c.l.b16 %v192
  %v453 = vunpack.c.l.b16 %v193
  %v454 = vunpack.c.l.b16 %v194
  %v455 = vunpack.c.l.b16 %v195
  %v456 = vunpack.c.l.b16 %v196
  %v457 = vunpack.c.l.b16 %v197
  %v458 = vunpack.c.l.b16 %v198
  %v459 = vunpack.c.l.b16 %v199
  %v460 = vpack.c.b16 %v333, %v332
  %v461 = vpack.c.b16 %v335, %v334
  %v462 = vpack.c.b16 %v337, %v336
  %v463 = vpack.c.b16 %v339, %v338
  %v464 = vpack.c.b16 %v341, %v340
  %v465 = vpack.c.b16 %v343, %v342
  %v466 = vpack.c.b16 %v345, %v344
  %v467 = vpack.c.b16 %v347, %v346
  %v468 = vpack.c.b16 %v349, %v348
  %v469 = vpack.c.b16 %v351, %v350
  %v470 = vpack.c.b16 %v353, %v352
  %v471 = vpack.c.b16 %v355, %v354
  %v472 = vpack.c.b16 %v357, %v356
  %v473 = vpack.c.b16 %v359, %v358
  %v474 = vpack.c.b16 %v361, %v360
  %v475 = vpack.c.b16 %v363, %v362
  %v476 = vpack.c.b16 %v365, %v364
  %v477 = vpack.c.b16 %v367, %v366
  %v478 = vpack.c.b16 %v369, %v368
  %v479 = vpack.c.b16 %v371, %v370
  %v480 = vpack.c.b16 %v373, %v372
  %v481 = vpack.c.b16 %v375, %v374
  %v482 = vpack.c.b16 %v377, %v376
  %v483 = vpack.c.b16 %v379, %v378
  %v484 = vpack.c.b16 %v381, %v380
  %v485 = vpack.c.b16 %v383, %v382
  %v486 = vpack.c.b16 %v385, %v384
  %v487 = vpack.c.b16 %v387, %v386
  %v488 = vpack.c.b16 %v389, %v388
  %v489 = vpack.c.b16 %v391, %v390
  %v490 = vpack.c.b16 %v393, %v392
  %v491 = vpack.c.b16 %v395, %v394
  %v492 = vpack.c.b16 %v397, %v396
  %v493 = vpack.c.b16 %v399, %v398
  %v494 = vpack.c.b16 %v401, %v400
  %v495 = vpack.c.b16 %v403, %v402
  %v496 = vpack.c.b16 %v405, %v404
  %v497 = vpack.c.b16 %v407, %v406
  %v498 = vpack.c.b16 %v409, %v408
  %v499 = vpack.c.b16 %v411, %v410
  %v500 = vpack.c.b16 %v413, %v412
  %v501 = vpack.c.b16 %v415, %v414
  %v502 = vpack.c.b16 %v417, %v416
  %v503 = vpack.c.b16 %v419, %v418
  %v504 = vpack.c.b16 %v421, %v420
  %v505 = vpack.c.b16 %v423, %v422
  %v506 = vpack.c.b16 %v425, %v424
  %v507 = vpack.c.b16 %v427, %v426
  %v508 = vpack.c.b16 %v429, %v428
  %v509 = vpack.c.b16 %v431, %v430
  %v510 = vpack.c.b16 %v433, %v432
  %v511 = vpack.c.b16 %v435, %v434
  %v512 = vpack.c.b16 %v437, %v436
  %v513 = vpack.c.b16 %v439, %v438
  %v514 = vpack.c.b16 %v441, %v440
  %v515 = vpack.c.b16 %v443, %v442
  %v516 = vpack.c.b16 %v445, %v444
  %v517 = vpack.c.b16 %v447, %v446
  %v518 = vpack.c.b16 %v449, %v448
  %v519 = vpack.c.b16 %v451, %v450
  %v520 = vpack.c.b16 %v453, %v452
  %v521 = vpack.c.b16 %v455, %v454
  %v522 = vpack.c.b16 %v457, %v456
  %v523 = vpack.c.b16 %v459, %v458
  %588 = vmatpush.bf16.msra.mxu0 %v467
  %589 = vmatpush.bf16.msra.mxu0 %v466
  %590 = vmatpush.bf16.msra.mxu0 %v465
  %591 = vmatpush.bf16.msra.mxu0 %v464
  %592 = vmatpush.bf16.msra.mxu0 %v463
  %593 = vmatpush.bf16.msra.mxu0 %v462
  %594 = vmatpush.bf16.msra.mxu0 %v461
  %595 = vmatpush.bf16.msra.mxu0 %v460
  %596 = vmatmul.bf16.gmra.mxu0 %v64
  %v597 = vpop.f32.mrf.mxu0
  %v598 = vadd.f32 %v202, %v597
  %v599 = vpop.f32.mrf.mxu0
  %600 = vdwg.mxu0
  %601 = vmatpush.bf16.msra.mxu0 %v475
  %602 = vmatpush.bf16.msra.mxu0 %v474
  %603 = vmatpush.bf16.msra.mxu0 %v473
  %604 = vmatpush.bf16.msra.mxu0 %v472
  %605 = vmatpush.bf16.msra.mxu0 %v471
  %606 = vmatpush.bf16.msra.mxu0 %v470
  %607 = vmatpush.bf16.msra.mxu0 %v469
  %608 = vmatpush.bf16.msra.mxu0 %v468
  %609 = vmatmul.bf16.gmra.mxu0 %v65
  %v610 = vpop.f32.mrf.mxu0
  %v611 = vadd.f32 %v598, %v610
  %v612 = vpop.f32.mrf.mxu0
  %613 = vdwg.mxu0
  %614 = vmatpush.bf16.msra.mxu0 %v483
  %615 = vmatpush.bf16.msra.mxu0 %v482
  %616 = vmatpush.bf16.msra.mxu0 %v481
  %617 = vmatpush.bf16.msra.mxu0 %v480
  %618 = vmatpush.bf16.msra.mxu0 %v479
  %619 = vmatpush.bf16.msra.mxu0 %v478
  %620 = vmatpush.bf16.msra.mxu0 %v477
  %621 = vmatpush.bf16.msra.mxu0 %v476
  %622 = vmatmul.bf16.gmra.mxu0 %v66
  %v623 = vpop.f32.mrf.mxu0
  %v624 = vadd.f32 %v611, %v623
  %v625 = vpop.f32.mrf.mxu0
  %626 = vdwg.mxu0
  %627 = vmatpush.bf16.msra.mxu0 %v491
  %628 = vmatpush.bf16.msra.mxu0 %v490
  %629 = vmatpush.bf16.msra.mxu0 %v489
  %630 = vmatpush.bf16.msra.mxu0 %v488
  %631 = vmatpush.bf16.msra.mxu0 %v487
  %632 = vmatpush.bf16.msra.mxu0 %v486
  %633 = vmatpush.bf16.msra.mxu0 %v485
  %634 = vmatpush.bf16.msra.mxu0 %v484
  %635 = vmatmul.bf16.gmra.mxu0 %v67
  %v636 = vpop.f32.mrf.mxu0
  %v637 = vadd.f32 %v624, %v636
  %v638 = vpop.f32.mrf.mxu0
  %639 = vdwg.mxu0
  %640 = vmatpush.bf16.msra.mxu0 %v499
  %641 = vmatpush.bf16.msra.mxu0 %v498
  %642 = vmatpush.bf16.msra.mxu0 %v497
  %643 = vmatpush.bf16.msra.mxu0 %v496
  %644 = vmatpush.bf16.msra.mxu0 %v495
  %645 = vmatpush.bf16.msra.mxu0 %v494
  %646 = vmatpush.bf16.msra.mxu0 %v493
  %647 = vmatpush.bf16.msra.mxu0 %v492
  %648 = vmatmul.bf16.gmra.mxu0 %v68
  %v649 = vpop.f32.mrf.mxu0
  %v650 = vadd.f32 %v637, %v649
  %v651 = vpop.f32.mrf.mxu0
  %652 = vdwg.mxu0
  %653 = vmatpush.bf16.msra.mxu0 %v507
  %654 = vmatpush.bf16.msra.mxu0 %v506
  %655 = vmatpush.bf16.msra.mxu0 %v505
  %656 = vmatpush.bf16.msra.mxu0 %v504
  %657 = vmatpush.bf16.msra.mxu0 %v503
  %658 = vmatpush.bf16.msra.mxu0 %v502
  %659 = vmatpush.bf16.msra.mxu0 %v501
  %660 = vmatpush.bf16.msra.mxu0 %v500
  %661 = vmatmul.bf16.gmra.mxu0 %v69
  %v662 = vpop.f32.mrf.mxu0
  %v663 = vadd.f32 %v650, %v662
  %v664 = vpop.f32.mrf.mxu0
  %665 = vdwg.mxu0
  %666 = vmatpush.bf16.msra.mxu0 %v515
  %667 = vmatpush.bf16.msra.mxu0 %v514
  %668 = vmatpush.bf16.msra.mxu0 %v513
  %669 = vmatpush.bf16.msra.mxu0 %v512
  %670 = vmatpush.bf16.msra.mxu0 %v511
  %671 = vmatpush.bf16.msra.mxu0 %v510
  %672 = vmatpush.bf16.msra.mxu0 %v509
  %673 = vmatpush.bf16.msra.mxu0 %v508
  %674 = vmatmul.bf16.gmra.mxu0 %v70
  %v675 = vpop.f32.mrf.mxu0
  %v676 = vadd.f32 %v663, %v675
  %v677 = vpop.f32.mrf.mxu0
  %678 = vdwg.mxu0
  %679 = vmatpush.bf16.msra.mxu0 %v523
  %680 = vmatpush.bf16.msra.mxu0 %v522
  %681 = vmatpush.bf16.msra.mxu0 %v521
  %682 = vmatpush.bf16.msra.mxu0 %v520
  %683 = vmatpush.bf16.msra.mxu0 %v519
  %684 = vmatpush.bf16.msra.mxu0 %v518
  %685 = vmatpush.bf16.msra.mxu0 %v517
  %686 = vmatpush.bf16.msra.mxu0 %v516
  %687 = vmatmul.bf16.gmra.mxu0 %v71
  %v688 = vpop.f32.mrf.mxu0
  %v689 = vadd.f32 %v676, %v688
  %v690 = vpop.f32.mrf.mxu0
  %691 = vdwg.mxu0
  %v692 = vmax.f32 %v689, 0.0
  %v693 = vpack.c.bf16 %v692, %v692
  %v694 = vld [vmem:[%s4] sm:$0xf]
  %v695 = vld [vmem:[%s4 + $0x4] sm:$0xf]
  %v696 = vld [vmem:[%s4 + $0x8] sm:$0xf]
  %v697 = vld [vmem:[%s4 + $0xc] sm:$0xf]
  %v698 = vld [vmem:[%s5] sm:$0x1]
  %v700 = vperm.slane %v698, 0
  %v706 = vunpack.c.l.b16 %v694
  %v707 = vunpack.c.l.b16 %v695
  %v708 = vunpack.c.l.b16 %v696
  %v709 = vunpack.c.l.b16 %v697
  %v710 = vpack.c.b16 %v707, %v706
  %v711 = vpack.c.b16 %v709, %v708
  %vm714 = vcmask 261120
  %v716 = vsel %vm714, %v693, 0
  %718 = vmatpush.bf16.msra.mxu0 0
  %719 = vmatpush.bf16.msra.mxu0 0
  %720 = vmatpush.bf16.msra.mxu0 0
  %721 = vmatpush.bf16.msra.mxu0 0
  %722 = vmatpush.bf16.msra.mxu0 0
  %723 = vmatpush.bf16.msra.mxu0 0
  %724 = vmatpush.bf16.msra.mxu0 %v711
  %725 = vmatpush.bf16.msra.mxu0 %v710
  %726 = vmatmul.bf16.gmra.mxu0 %v716
  %v727 = vpop.f32.mrf.mxu0
  %v728 = vadd.f32 %v700, %v727
  %v729 = vpop.f32.mrf.mxu0
  %730 = vdwg.mxu0
  %v731 = vmax.f32 %v728, 0.0
  %v732 = vpack.c.bf16 %v731, %v731
  %v733 = vld [vmem:[%s6] sm:$0xf]
  %v734 = vld [vmem:[%s6 + $0x4] sm:$0xf]
  %v735 = vld [vmem:[%s6 + $0x8] sm:$0xf]
  %v736 = vld [vmem:[%s6 + $0xc] sm:$0xf]
  %v737 = vld [vmem:[%s7] sm:$0x1]
  %v739 = vperm.slane %v737, 0
  %v745 = vunpack.c.l.b16 %v733
  %v746 = vunpack.c.l.b16 %v734
  %v747 = vunpack.c.l.b16 %v735
  %v748 = vunpack.c.l.b16 %v736
  %v749 = vpack.c.b16 %v746, %v745
  %v750 = vpack.c.b16 %v748, %v747
  %v754 = vsel %vm714, %v732, 0
  %756 = vmatpush.bf16.msra.mxu0 0
  %757 = vmatpush.bf16.msra.mxu0 0
  %758 = vmatpush.bf16.msra.mxu0 0
  %759 = vmatpush.bf16.msra.mxu0 0
  %760 = vmatpush.bf16.msra.mxu0 0
  %761 = vmatpush.bf16.msra.mxu0 0
  %762 = vmatpush.bf16.msra.mxu0 %v750
  %763 = vmatpush.bf16.msra.mxu0 %v749
  %764 = vmatmul.bf16.gmra.mxu0 %v754
  %v765 = vpop.f32.mrf.mxu0
  %v766 = vadd.f32 %v739, %v765
  %v767 = vpop.f32.mrf.mxu0
  %768 = vdwg.mxu0
  %v769 = vmax.f32 %v766, 0.0
  %v770 = vpack.c.bf16 %v769, %v769
  %v771 = vld [vmem:[%s8] sm:$0xf]
  %v772 = vld [vmem:[%s8 + $0x4] sm:$0xf]
  %v773 = vld [vmem:[%s9] sm:$0x1]
  %v775 = vperm.slane %v773, 0
  %v779 = vunpack.c.l.b16 %v771
  %v780 = vunpack.c.l.b16 %v772
  %v781 = vpack.c.b16 %v780, %v779
  %vm783 = vcmask 130048
  %v785 = vsel %vm783, %v770, 0
  %787 = vmatpush.bf16.msra.mxu0 0
  %788 = vmatpush.bf16.msra.mxu0 0
  %789 = vmatpush.bf16.msra.mxu0 0
  %790 = vmatpush.bf16.msra.mxu0 0
  %791 = vmatpush.bf16.msra.mxu0 0
  %792 = vmatpush.bf16.msra.mxu0 0
  %793 = vmatpush.bf16.msra.mxu0 0
  %794 = vmatpush.bf16.msra.mxu0 %v781
  %795 = vmatmul.bf16.gmra.mxu0 %v785
  %v796 = vpop.f32.mrf.mxu0
  %v797 = vadd.f32 %v775, %v796
  %v798 = vpop.f32.mrf.mxu0
  %799 = vdwg.mxu0
  %v800 = vld [vmem:[%s1] sm:$0xff]
  %v801 = vmul.f32 %v797, 0.5
  %v802 = vmul.f32 %v801, 1.442695
  %v803 = vpow.pop %v802
  %805 = vrot.lane.b32.xlu0 %v803, 112
  %v806 = vpop.permute.xlu0 %805
  %v808 = vmul.f32 %v800, %v806
  %v809 = vadd.f32 %v797, %v808
  %v810 = vpack.c.bf16 %v809, %v809
  %v811 = vld [vmem:[%s10] sm:$0xf]
  %v812 = vld [vmem:[%s10 + $0x4] sm:$0xf]
  %v813 = vld [vmem:[%s11] sm:$0x1]
  %v815 = vperm.slane %v813, 0
  %v819 = vunpack.c.l.b16 %v811
  %v820 = vunpack.c.l.b16 %v812
  %v821 = vpack.c.b16 %v820, %v819
  %v824 = vsel %vm783, %v810, 0
  %826 = vmatpush.bf16.msra.mxu0 0
  %827 = vmatpush.bf16.msra.mxu0 0
  %828 = vmatpush.bf16.msra.mxu0 0
  %829 = vmatpush.bf16.msra.mxu0 0
  %830 = vmatpush.bf16.msra.mxu0 0
  %831 = vmatpush.bf16.msra.mxu0 0
  %832 = vmatpush.bf16.msra.mxu0 0
  %833 = vmatpush.bf16.msra.mxu0 %v821
  %834 = vmatmul.bf16.gmra.mxu0 %v824
  %v835 = vpop.f32.mrf.mxu0
  %v836 = vadd.f32 %v815, %v835
  %v837 = vpop.f32.mrf.mxu0
  %838 = vdwg.mxu0
  %v839 = vmax.f32 %v836, 0.0
  %v840 = vpack.c.bf16 %v839, %v839
  %v841 = vld [vmem:[%s12] sm:$0xf]
  %v842 = vld [vmem:[%s12 + $0x4] sm:$0xf]
  %v843 = vld [vmem:[%s12 + $0x8] sm:$0xf]
  %v844 = vld [vmem:[%s12 + $0xc] sm:$0xf]
  %v845 = vld [vmem:[%s13] sm:$0x1]
  %v847 = vperm.slane %v845, 0
  %v853 = vunpack.c.l.b16 %v841
  %v854 = vunpack.c.l.b16 %v842
  %v855 = vunpack.c.l.b16 %v843
  %v856 = vunpack.c.l.b16 %v844
  %v857 = vpack.c.b16 %v854, %v853
  %v858 = vpack.c.b16 %v856, %v855
  %v862 = vsel %vm714, %v840, 0
  %864 = vmatpush.bf16.msra.mxu0 0
  %865 = vmatpush.bf16.msra.mxu0 0
  %866 = vmatpush.bf16.msra.mxu0 0
  %867 = vmatpush.bf16.msra.mxu0 0
  %868 = vmatpush.bf16.msra.mxu0 0
  %869 = vmatpush.bf16.msra.mxu0 0
  %870 = vmatpush.bf16.msra.mxu0 %v858
  %871 = vmatpush.bf16.msra.mxu0 %v857
  %872 = vmatmul.bf16.gmra.mxu0 %v862
  %v873 = vpop.f32.mrf.mxu0
  %v874 = vadd.f32 %v847, %v873
  %v875 = vpop.f32.mrf.mxu0
  %876 = vdwg.mxu0
  %v877 = vmax.f32 %v874, 0.0
  %v878 = vpack.c.bf16 %v877, %v877
  %v879 = vld [vmem:[%s14] sm:$0xff]
  %v880 = vld [vmem:[%s14 + $0x8] sm:$0xff]
  %v881 = vld [vmem:[%s14 + $0x10] sm:$0xff]
  %v882 = vld [vmem:[%s14 + $0x18] sm:$0xff]
  %v883 = vld [vmem:[%s14 + $0x20] sm:$0xff]
  %v884 = vld [vmem:[%s14 + $0x28] sm:$0xff]
  %v885 = vld [vmem:[%s14 + $0x30] sm:$0xff]
  %v886 = vld [vmem:[%s14 + $0x38] sm:$0xff]
  %v887 = vld [vmem:[%s14 + $0x40] sm:$0xff]
  %v888 = vld [vmem:[%s14 + $0x48] sm:$0xff]
  %v889 = vld [vmem:[%s14 + $0x50] sm:$0xff]
  %v890 = vld [vmem:[%s14 + $0x58] sm:$0xff]
  %v891 = vld [vmem:[%s14 + $0x60] sm:$0xff]
  %v892 = vld [vmem:[%s14 + $0x68] sm:$0xff]
  %v893 = vld [vmem:[%s14 + $0x70] sm:$0xff]
  %v894 = vld [vmem:[%s14 + $0x78] sm:$0xff]
  %v895 = vld [vmem:[%s15] sm:$0xff]
  %v897 = vperm.slane %v895, 0
  %v898 = vperm.slane %v895, 1
  %v899 = vperm.slane %v895, 2
  %v900 = vperm.slane %v895, 3
  %v901 = vperm.slane %v895, 4
  %v902 = vperm.slane %v895, 5
  %v903 = vperm.slane %v895, 6
  %v904 = vperm.slane %v895, 7
  %v929 = vunpack.c.l.b16 %v879
  %v930 = vunpack.c.h.b16 %v879
  %v931 = vunpack.c.l.b16 %v880
  %v932 = vunpack.c.h.b16 %v880
  %v933 = vunpack.c.l.b16 %v881
  %v934 = vunpack.c.h.b16 %v881
  %v935 = vunpack.c.l.b16 %v882
  %v936 = vunpack.c.h.b16 %v882
  %v937 = vunpack.c.l.b16 %v883
  %v938 = vunpack.c.h.b16 %v883
  %v939 = vunpack.c.l.b16 %v884
  %v940 = vunpack.c.h.b16 %v884
  %v941 = vunpack.c.l.b16 %v885
  %v942 = vunpack.c.h.b16 %v885
  %v943 = vunpack.c.l.b16 %v886
  %v944 = vunpack.c.h.b16 %v886
  %v945 = vunpack.c.l.b16 %v887
  %v946 = vunpack.c.h.b16 %v887
  %v947 = vunpack.c.l.b16 %v888
  %v948 = vunpack.c.h.b16 %v888
  %v949 = vunpack.c.l.b16 %v889
  %v950 = vunpack.c.h.b16 %v889
  %v951 = vunpack.c.l.b16 %v890
  %v952 = vunpack.c.h.b16 %v890
  %v953 = vunpack.c.l.b16 %v891
  %v954 = vunpack.c.h.b16 %v891
  %v955 = vunpack.c.l.b16 %v892
  %v956 = vunpack.c.h.b16 %v892
  %v957 = vunpack.c.l.b16 %v893
  %v958 = vunpack.c.h.b16 %v893
  %v959 = vunpack.c.l.b16 %v894
  %v960 = vunpack.c.h.b16 %v894
  %v961 = vpack.c.b16 %v937, %v929
  %v962 = vpack.c.b16 %v938, %v930
  %v963 = vpack.c.b16 %v939, %v931
  %v964 = vpack.c.b16 %v940, %v932
  %v965 = vpack.c.b16 %v941, %v933
  %v966 = vpack.c.b16 %v942, %v934
  %v967 = vpack.c.b16 %v943, %v935
  %v968 = vpack.c.b16 %v944, %v936
  %v969 = vpack.c.b16 %v953, %v945
  %v970 = vpack.c.b16 %v954, %v946
  %v971 = vpack.c.b16 %v955, %v947
  %v972 = vpack.c.b16 %v956, %v948
  %v973 = vpack.c.b16 %v957, %v949
  %v974 = vpack.c.b16 %v958, %v950
  %v975 = vpack.c.b16 %v959, %v951
  %v976 = vpack.c.b16 %v960, %v952
  %v994 = vsel %vm714, %v878, 0
  %996 = vmatpush.bf16.msra.mxu0 0
  %997 = vmatpush.bf16.msra.mxu0 0
  %998 = vmatpush.bf16.msra.mxu0 0
  %999 = vmatpush.bf16.msra.mxu0 0
  %1000 = vmatpush.bf16.msra.mxu0 0
  %1001 = vmatpush.bf16.msra.mxu0 0
  %1002 = vmatpush.bf16.msra.mxu0 %v969
  %1003 = vmatpush.bf16.msra.mxu0 %v961
  %1004 = vmatmul.bf16.gmra.mxu0 %v994
  %v1005 = vpop.f32.mrf.mxu0
  %v1006 = vadd.f32 %v897, %v1005
  %v1007 = vpop.f32.mrf.mxu0
  %1008 = vdwg.mxu0
  %1009 = vmatpush.bf16.msra.mxu0 0
  %1010 = vmatpush.bf16.msra.mxu0 0
  %1011 = vmatpush.bf16.msra.mxu0 0
  %1012 = vmatpush.bf16.msra.mxu0 0
  %1013 = vmatpush.bf16.msra.mxu0 0
  %1014 = vmatpush.bf16.msra.mxu0 0
  %1015 = vmatpush.bf16.msra.mxu0 %v970
  %1016 = vmatpush.bf16.msra.mxu0 %v962
  %1017 = vmatmul.bf16.gmra.mxu0 %v994
  %v1018 = vpop.f32.mrf.mxu0
  %v1019 = vadd.f32 %v898, %v1018
  %v1020 = vpop.f32.mrf.mxu0
  %1021 = vdwg.mxu0
  %1022 = vmatpush.bf16.msra.mxu0 0
  %1023 = vmatpush.bf16.msra.mxu0 0
  %1024 = vmatpush.bf16.msra.mxu0 0
  %1025 = vmatpush.bf16.msra.mxu0 0
  %1026 = vmatpush.bf16.msra.mxu0 0
  %1027 = vmatpush.bf16.msra.mxu0 0
  %1028 = vmatpush.bf16.msra.mxu0 %v971
  %1029 = vmatpush.bf16.msra.mxu0 %v963
  %1030 = vmatmul.bf16.gmra.mxu0 %v994
  %v1031 = vpop.f32.mrf.mxu0
  %v1032 = vadd.f32 %v899, %v1031
  %v1033 = vpop.f32.mrf.mxu0
  %1034 = vdwg.mxu0
  %1035 = vmatpush.bf16.msra.mxu0 0
  %1036 = vmatpush.bf16.msra.mxu0 0
  %1037 = vmatpush.bf16.msra.mxu0 0
  %1038 = vmatpush.bf16.msra.mxu0 0
  %1039 = vmatpush.bf16.msra.mxu0 0
  %1040 = vmatpush.bf16.msra.mxu0 0
  %1041 = vmatpush.bf16.msra.mxu0 %v972
  %1042 = vmatpush.bf16.msra.mxu0 %v964
  %1043 = vmatmul.bf16.gmra.mxu0 %v994
  %v1044 = vpop.f32.mrf.mxu0
  %v1045 = vadd.f32 %v900, %v1044
  %v1046 = vpop.f32.mrf.mxu0
  %1047 = vdwg.mxu0
  %1048 = vmatpush.bf16.msra.mxu0 0
  %1049 = vmatpush.bf16.msra.mxu0 0
  %1050 = vmatpush.bf16.msra.mxu0 0
  %1051 = vmatpush.bf16.msra.mxu0 0
  %1052 = vmatpush.bf16.msra.mxu0 0
  %1053 = vmatpush.bf16.msra.mxu0 0
  %1054 = vmatpush.bf16.msra.mxu0 %v973
  %1055 = vmatpush.bf16.msra.mxu0 %v965
  %1056 = vmatmul.bf16.gmra.mxu0 %v994
  %v1057 = vpop.f32.mrf.mxu0
  %v1058 = vadd.f32 %v901, %v1057
  %v1059 = vpop.f32.mrf.mxu0
  %1060 = vdwg.mxu0
  %1061 = vmatpush.bf16.msra.mxu0 0
  %1062 = vmatpush.bf16.msra.mxu0 0
  %1063 = vmatpush.bf16.msra.mxu0 0
  %1064 = vmatpush.bf16.msra.mxu0 0
  %1065 = vmatpush.bf16.msra.mxu0 0
  %1066 = vmatpush.bf16.msra.mxu0 0
  %1067 = vmatpush.bf16.msra.mxu0 %v974
  %1068 = vmatpush.bf16.msra.mxu0 %v966
  %1069 = vmatmul.bf16.gmra.mxu0 %v994
  %v1070 = vpop.f32.mrf.mxu0
  %v1071 = vadd.f32 %v902, %v1070
  %v1072 = vpop.f32.mrf.mxu0
  %1073 = vdwg.mxu0
  %1074 = vmatpush.bf16.msra.mxu0 0
  %1075 = vmatpush.bf16.msra.mxu0 0
  %1076 = vmatpush.bf16.msra.mxu0 0
  %1077 = vmatpush.bf16.msra.mxu0 0
  %1078 = vmatpush.bf16.msra.mxu0 0
  %1079 = vmatpush.bf16.msra.mxu0 0
  %1080 = vmatpush.bf16.msra.mxu0 %v975
  %1081 = vmatpush.bf16.msra.mxu0 %v967
  %1082 = vmatmul.bf16.gmra.mxu0 %v994
  %v1083 = vpop.f32.mrf.mxu0
  %v1084 = vadd.f32 %v903, %v1083
  %v1085 = vpop.f32.mrf.mxu0
  %1086 = vdwg.mxu0
  %1087 = vmatpush.bf16.msra.mxu0 0
  %1088 = vmatpush.bf16.msra.mxu0 0
  %1089 = vmatpush.bf16.msra.mxu0 0
  %1090 = vmatpush.bf16.msra.mxu0 0
  %1091 = vmatpush.bf16.msra.mxu0 0
  %1092 = vmatpush.bf16.msra.mxu0 0
  %1093 = vmatpush.bf16.msra.mxu0 %v976
  %1094 = vmatpush.bf16.msra.mxu0 %v968
  %1095 = vmatmul.bf16.gmra.mxu0 %v994
  %v1096 = vpop.f32.mrf.mxu0
  %v1097 = vadd.f32 %v904, %v1096
  %v1098 = vpop.f32.mrf.mxu0
  %1099 = vdwg.mxu0
  %v1100 = vmul.f32 %v1006, 0.5
  %v1101 = vmul.f32 %v1019, 0.5
  %v1102 = vmul.f32 %v1032, 0.5
  %v1103 = vmul.f32 %v1045, 0.5
  %v1104 = vmul.f32 %v1058, 0.5
  %v1105 = vmul.f32 %v1071, 0.5
  %v1106 = vmul.f32 %v1084, 0.5
  %v1107 = vmul.f32 %v1097, 0.5
  %v1108 = vtanh.pop %v1100
  %v1109 = vtanh.pop %v1101
  %v1110 = vtanh.pop %v1102
  %v1111 = vtanh.pop %v1103
  %v1112 = vtanh.pop %v1104
  %v1113 = vtanh.pop %v1105
  %v1114 = vtanh.pop %v1106
  %v1115 = vtanh.pop %v1107
  %v1116 = vmul.f32 %v1108, 0.5
  %v1117 = vmul.f32 %v1109, 0.5
  %v1118 = vmul.f32 %v1110, 0.5
  %v1119 = vmul.f32 %v1111, 0.5
  %v1120 = vmul.f32 %v1112, 0.5
  %v1121 = vmul.f32 %v1113, 0.5
  %v1122 = vmul.f32 %v1114, 0.5
  %v1123 = vmul.f32 %v1115, 0.5
  %v1124 = vadd.f32 %v1116, 0.5
  %v1125 = vadd.f32 %v1117, 0.5
  %v1126 = vadd.f32 %v1118, 0.5
  %v1127 = vadd.f32 %v1119, 0.5
  %v1128 = vadd.f32 %v1120, 0.5
  %v1129 = vadd.f32 %v1121, 0.5
  %v1130 = vadd.f32 %v1122, 0.5
  %v1131 = vadd.f32 %v1123, 0.5
  %1132 = vst [vmem:[%s17] sm:$0xff] %v1124
  %1133 = vst [vmem:[%s17 + $0x8] sm:$0xff] %v1125
  %1134 = vst [vmem:[%s17 + $0x10] sm:$0xff] %v1126
  %1135 = vst [vmem:[%s17 + $0x18] sm:$0xff] %v1127
  %1136 = vst [vmem:[%s17 + $0x20] sm:$0xff] %v1128
  %1137 = vst [vmem:[%s17 + $0x28] sm:$0xff] %v1129
  %1138 = vst [vmem:[%s17 + $0x30] sm:$0xff] %v1130
  %1139 = vst [vmem:[%s17 + $0x38] sm:$0xff] %v1131
  %1140 = vst.msk [vmem:[%s16] sm:$0xff] %vm783, %v769
  %1142 = vrot.lane.b32.xlu0 %v797, 16
  %v1143 = vpop.permute.xlu0 %1142
  %vm1145 = vcmask 392320
  %1146 = vst.msk [vmem:[%s16] sm:$0xff] %vm1145, %v1143
  %vm1147 = vcmask 1047936
  %1148 = vst.msk [vmem:[%s16] sm:$0xff] %vm1147, 0.0
  // Predicated region
  $region66: #{vae_forward.1} parent=0 // pred_check
    _
  $region67: #{vae_forward.1} parent=0 // pred_check_branch
    %1150 = sbr.rel (0) target = $region69
  $region68: #{vae_forward.1} parent=0 // pred_region
    _
  $region69: #{vae_forward.1} parent=0 // pred_fallthru
    _
  // Predicated region
  $region70: #{vae_forward.1} parent=0 // pred_check
    _
  $region71: #{vae_forward.1} parent=0 // pred_check_branch
    %1152 = sbr.rel (0) target = $region73
  $region72: #{vae_forward.1} parent=0 // pred_region
    _
  $region73: #{vae_forward.1} parent=0 // pred_fallthru
    _
  // Predicated region
  $region74: #{vae_forward.1} parent=0 // pred_check
    _
  $region75: #{vae_forward.1} parent=0 // pred_check_branch
    %1154 = sbr.rel (0) target = $region77
  $region76: #{vae_forward.1} parent=0 // pred_region
    _
  $region77: #{vae_forward.1} parent=0 // pred_fallthru
    _
  // Predicated region
  $region78: #{vae_forward.1} parent=0 // pred_check
    _
  $region79: #{vae_forward.1} parent=0 // pred_check_branch
    %1156 = sbr.rel (0) target = $region81
  $region80: #{vae_forward.1} parent=0 // pred_region
    _
  $region81: #{vae_forward.1} parent=0 // pred_fallthru
    _

</llo_original>
